<compile_context>
chip_gen: v6e
topology: v6e:2x2x1
jax: 0.10.0
libtpu: 0.0.40
codegen_flags: <defaults>
</compile_context>

<pallas_src>
import jax
import jax.numpy as jnp
from jax import lax
from jax.experimental import pallas as pl
from jax.experimental.pallas import tpu as pltpu


def _linear_kernel(x_ref, w_ref, b_ref, o_ref):
    """out = x @ w.T + b, computed in a single step with f32 accumulation.

    x_ref: (B, K)  activations
    w_ref: (N, K)  weight in native PyTorch nn.Linear layout (out_dim, in_dim)
    b_ref: (1, N)  bias
    o_ref: (B, N)  output
    """
    # Contract over the last axis of both operands: 'bk,nk->bn'.
    acc = lax.dot_general(
        x_ref[...],
        w_ref[...],
        dimension_numbers=(((1,), (1,)), ((), ())),
        preferred_element_type=jnp.float32,
    )
    o_ref[...] = (acc + b_ref[...]).astype(o_ref.dtype)


def encoder_forward(feat, weight, bias):
    """feat: (B, K) f32; weight: (N, K) f32 (PyTorch layout); bias: (1, N) f32.

    Returns (B, N) f32 = feat @ weight.T + bias.
    """
    B, K = feat.shape
    N, Kw = weight.shape
    assert K == Kw and bias.shape == (1, N)

    # Whole-array blocks, no grid: everything lives in VMEM for one invocation.
    return pl.pallas_call(
        _linear_kernel,
        out_shape=jax.ShapeDtypeStruct((B, N), jnp.float32),
        in_specs=[
            pl.BlockSpec((B, K), lambda: (0, 0)),   # activations, lane-dense K
            pl.BlockSpec((N, K), lambda: (0, 0)),   # weight, lane-dense K
            pl.BlockSpec((1, N), lambda: (0, 0)),   # bias
        ],
        out_specs=pl.BlockSpec((B, N), lambda: (0, 0)),
    )(feat, weight, bias)


if __name__ == "__main__":
    # Shapes consistent with Encoder(input_dim=2816, out_dim=8).
    B, INPUT_DIM, OUT_DIM = 8, 2816, 8

    key = jax.random.PRNGKey(0)
    k_feat, k_w, k_b = jax.random.split(key, 3)

    # Deterministic "init" mimicking nn.Linear default: U(-1/sqrt(in), 1/sqrt(in)).
    bound = 1.0 / (INPUT_DIM ** 0.5)
    # Weight kept in native PyTorch layout (out_dim, in_dim).
    weight = jax.random.uniform(
        k_w, (OUT_DIM, INPUT_DIM), minval=-bound, maxval=bound, dtype=jnp.float32
    )
    bias = jax.random.uniform(
        k_b, (1, OUT_DIM), minval=-bound, maxval=bound, dtype=jnp.float32
    )
    feat = jax.random.normal(k_feat, (B, INPUT_DIM), dtype=jnp.float32)

    out = encoder_forward(feat, weight, bias)
    out = jax.block_until_ready(out)

    # Pure-JAX reference check (matches torch: feat @ W.T + b).
    ref = feat @ weight.T + bias
    assert out.shape == (B, OUT_DIM)
    assert jnp.allclose(out, ref, atol=1e-4, rtol=1e-4), "mismatch vs reference"

    print("KERNEL_OK")
</pallas_src>

<mosaic_0001>
module attributes {stable_mosaic.version = 11 : i64} {
  func.func @_linear_kernel(%arg0: memref<8x2816xf32, #tpu.memory_space<vmem>>, %arg1: memref<8x2816xf32, #tpu.memory_space<vmem>>, %arg2: memref<1x8xf32, #tpu.memory_space<vmem>>, %arg3: memref<8x8xf32, #tpu.memory_space<vmem>>) attributes {dimension_semantics = [], scalar_prefetch = 0 : i64, scratch_operands = 0 : i64, tpu.core_type = #tpu.core_type<tc>} {
    %c0 = arith.constant 0 : index
    %c0_0 = arith.constant 0 : index
    %0 = vector.load %arg0[%c0, %c0_0] : memref<8x2816xf32, #tpu.memory_space<vmem>>, vector<8x2816xf32>
    %c0_1 = arith.constant 0 : index
    %c0_2 = arith.constant 0 : index
    %1 = vector.load %arg1[%c0_1, %c0_2] : memref<8x2816xf32, #tpu.memory_space<vmem>>, vector<8x2816xf32>
    %cst = arith.constant dense<0.000000e+00> : vector<8x8xf32>
    %2 = tpu.matmul %0, %1, %cst {dimension_numbers = #tpu.dot_dimension_numbers<[1], [1], [0], [0], [0, 0, 1, 0], [], []>} : vector<8x2816xf32>, vector<8x2816xf32>, vector<8x8xf32> -> vector<8x8xf32>
    %c0_3 = arith.constant 0 : index
    %c0_4 = arith.constant 0 : index
    %3 = vector.load %arg2[%c0_3, %c0_4] : memref<1x8xf32, #tpu.memory_space<vmem>>, vector<1x8xf32>
    %4 = vector.broadcast %3 : vector<1x8xf32> to vector<8x8xf32>
    %5 = arith.addf %2, %4 : vector<8x8xf32>
    %c0_5 = arith.constant 0 : index
    %c0_6 = arith.constant 0 : index
    %6 = vector.load %arg3[%c0_5, %c0_6] : memref<8x8xf32, #tpu.memory_space<vmem>>, vector<8x8xf32>
    tpu.vector_store %arg3[%c0_5, %c0_6], %5 {strides = array<i32>} : memref<8x8xf32, #tpu.memory_space<vmem>>, vector<8x8xf32>,
    return
  }
}

</mosaic_0001>

<llo_original>
// kernel: tpu_custom_call.1
$region0: #{tpu_custom_call.1}
  #allocation0 [shape = 'u32[]', space=smem, size = 0x4, offset = 0x4, fixed_abs, tag = 'smem constant byte address 0x4 - core index']
  #allocation1 [shape = 'u32[144,128]{1,0:T(1,128)}', space=vmem, size = 0x12000, scoped, tag = 'internal scratch']
  %s0 = inlined_call_operand.hbm [shape: f32[8,2816], index: 0, kind: input, shape index: {}]
  %s1 = inlined_call_operand.hbm [shape: f32[8,2816], index: 1, kind: input, shape index: {}]
  %s2 = inlined_call_operand.vmem [shape: f32[1,8], index: 2, kind: input, shape index: {}]
  %s3 = inlined_call_operand.hbm [shape: f32[8,8], index: 3, kind: output, shape index: {}]
  %s4 = sld [smem:[#allocation0]]
  $region30: #{tpu_custom_call.1} parent=0
    _
  %s6 = ssub.s32 1, %s4
  %s7 = scalar_select 0, %s6, %s4
  $region1: #{tpu_custom_call.1} parent=0
    #allocation2 [shape = 'u8[90112]{0}', space=vmem, size = 0x16000, scoped, tag = 'input window, operand 0, single buffered']
    #allocation3 [shape = 's32[1]{0}', space=sflag, size = 0x4, scoped, tag = 'scoped memory for tpu_custom_call.1']
    #allocation4 [shape = 's32[1]{0}', space=sflag, size = 0x4, scoped, tag = 'scoped memory for tpu_custom_call.1']
    #allocation5 [shape = 'u8[90112]{0}', space=vmem, size = 0x16000, scoped, tag = 'input window, operand 1, single buffered']
    #allocation6 [shape = 's32[1]{0}', space=sflag, size = 0x4, scoped, tag = 'scoped memory for tpu_custom_call.1']
    #allocation7 [shape = 'u8[4096]{0}', space=vmem, size = 0x1000, scoped, tag = 'output window, operand 0, single buffered']
    %8 = vsyncpa [#allocation3], 0
    %9 = vsyncpa [#allocation6], 0
    %10 = vsyncpa [#allocation4], 0
    // Predicated region
    $region2: #{tpu_custom_call.1} parent=1 // pred_check
      _
    $region3: #{tpu_custom_call.1} parent=1 // pred_check_branch
      %12 = sbr.rel (0) target = $region5
    $region4: #{tpu_custom_call.1} parent=1 // pred_region
      %s14 = ssub.s32 2816, 2816
      %15 = vsyncadd [#allocation3], %s14
      %s17 = sshll.u32 [#allocation2], 4
      %s18 = int_to_ptr.vmem [resolvable:$true] %s17
      %20 = dma.hbm_to_vmem [thread:$0]  %s0, 2816, %s18, [#allocation3]
    $region5: #{tpu_custom_call.1} parent=1 // pred_fallthru
      _
    // Predicated region
    $region6: #{tpu_custom_call.1} parent=1 // pred_check
      _
    $region7: #{tpu_custom_call.1} parent=1 // pred_check_branch
      %22 = sbr.rel (0) target = $region9
    $region8: #{tpu_custom_call.1} parent=1 // pred_region
      %s24 = ssub.s32 2816, 2816
      %25 = vsyncadd [#allocation6], %s24
      %s27 = sshll.u32 [#allocation5], 4
      %s28 = int_to_ptr.vmem [resolvable:$true] %s27
      %30 = dma.hbm_to_vmem [thread:$0]  %s1, 2816, %s28, [#allocation6]
    $region9: #{tpu_custom_call.1} parent=1 // pred_fallthru
      _
    // Predicated region
    $region10: #{tpu_custom_call.1} parent=1 // pred_check
      _
    $region11: #{tpu_custom_call.1} parent=1 // pred_check_branch
      %32 = sbr.rel (0) target = $region13
    $region12: #{tpu_custom_call.1} parent=1 // pred_region
      _
    $region13: #{tpu_custom_call.1} parent=1 // pred_fallthru
      _
    // Predicated region
    $region14: #{tpu_custom_call.1} parent=1 // pred_check
      _
    $region15: #{tpu_custom_call.1} parent=1 // pred_check_branch
      %34 = sbr.rel (0) target = $region17
    $region16: #{tpu_custom_call.1} parent=1 // pred_region
      %35 = dma.done [#allocation3], 2816
    $region17: #{tpu_custom_call.1} parent=1 // pred_fallthru
      _
    // Predicated region
    $region18: #{tpu_custom_call.1} parent=1 // pred_check
      _
    $region19: #{tpu_custom_call.1} parent=1 // pred_check_branch
      %37 = sbr.rel (0) target = $region21
    $region20: #{tpu_custom_call.1} parent=1 // pred_region
      %38 = dma.done [#allocation6], 2816
    $region21: #{tpu_custom_call.1} parent=1 // pred_fallthru
      _
    %v39 = vld [vmem:[#allocation2] sm:$0xff]
    %v40 = vld [vmem:[#allocation2 + $0x8] sm:$0xff]
    %v41 = vld [vmem:[#allocation2 + $0x10] sm:$0xff]
    %v42 = vld [vmem:[#allocation2 + $0x18] sm:$0xff]
    %v43 = vld [vmem:[#allocation2 + $0x20] sm:$0xff]
    %v44 = vld [vmem:[#allocation2 + $0x28] sm:$0xff]
    %v45 = vld [vmem:[#allocation2 + $0x30] sm:$0xff]
    %v46 = vld [vmem:[#allocation2 + $0x38] sm:$0xff]
    %v47 = vld [vmem:[#allocation2 + $0x40] sm:$0xff]
    %v48 = vld [vmem:[#allocation2 + $0x48] sm:$0xff]
    %v49 = vld [vmem:[#allocation2 + $0x50] sm:$0xff]
    %v50 = vld [vmem:[#allocation2 + $0x58] sm:$0xff]
    %v51 = vld [vmem:[#allocation2 + $0x60] sm:$0xff]
    %v52 = vld [vmem:[#allocation2 + $0x68] sm:$0xff]
    %v53 = vld [vmem:[#allocation2 + $0x70] sm:$0xff]
    %v54 = vld [vmem:[#allocation2 + $0x78] sm:$0xff]
    %v55 = vld [vmem:[#allocation2 + $0x80] sm:$0xff]
    %v56 = vld [vmem:[#allocation2 + $0x88] sm:$0xff]
    %v57 = vld [vmem:[#allocation2 + $0x90] sm:$0xff]
    %v58 = vld [vmem:[#allocation2 + $0x98] sm:$0xff]
    %v59 = vld [vmem:[#allocation2 + $0xa0] sm:$0xff]
    %v60 = vld [vmem:[#allocation2 + $0xa8] sm:$0xff]
    %v61 = vld [vmem:[#allocation5] sm:$0xff]
    %v62 = vld [vmem:[#allocation5 + $0x8] sm:$0xff]
    %v63 = vld [vmem:[#allocation5 + $0x10] sm:$0xff]
    %v64 = vld [vmem:[#allocation5 + $0x18] sm:$0xff]
    %v65 = vld [vmem:[#allocation5 + $0x20] sm:$0xff]
    %v66 = vld [vmem:[#allocation5 + $0x28] sm:$0xff]
    %v67 = vld [vmem:[#allocation5 + $0x30] sm:$0xff]
    %v68 = vld [vmem:[#allocation5 + $0x38] sm:$0xff]
    %v69 = vld [vmem:[#allocation5 + $0x40] sm:$0xff]
    %v70 = vld [vmem:[#allocation5 + $0x48] sm:$0xff]
    %v71 = vld [vmem:[#allocation5 + $0x50] sm:$0xff]
    %v72 = vld [vmem:[#allocation5 + $0x58] sm:$0xff]
    %v73 = vld [vmem:[#allocation5 + $0x60] sm:$0xff]
    %v74 = vld [vmem:[#allocation5 + $0x68] sm:$0xff]
    %v75 = vld [vmem:[#allocation5 + $0x70] sm:$0xff]
    %v76 = vld [vmem:[#allocation5 + $0x78] sm:$0xff]
    %v77 = vld [vmem:[#allocation5 + $0x80] sm:$0xff]
    %v78 = vld [vmem:[#allocation5 + $0x88] sm:$0xff]
    %v79 = vld [vmem:[#allocation5 + $0x90] sm:$0xff]
    %v80 = vld [vmem:[#allocation5 + $0x98] sm:$0xff]
    %v81 = vld [vmem:[#allocation5 + $0xa0] sm:$0xff]
    %v82 = vld [vmem:[#allocation5 + $0xa8] sm:$0xff]
    %v83 = vld [vmem:[%s2] sm:$0x1]
    %v85 = vlaneseq
    %v86 = vshrl.u32 %v85, 7
    %v87 = vsub.s32 0, %v86
    %v88 = vrot.slane %v83, %v87
    %90 = vmatprep.subr.mxu0 0.0
    %91 = vmatpush1.xpose.msra.mxu0 0.0
    %92 = vmatprep.subr.mxu0 0.0
    %93 = vmatpush1.xpose.msra.mxu0 0.0
    %94 = vmatprep.subr.mxu0 0.0
    %95 = vmatpush1.xpose.msra.mxu0 0.0
    %96 = vmatprep.subr.mxu0 0.0
    %97 = vmatpush1.xpose.msra.mxu0 0.0
    %98 = vmatprep.subr.mxu0 0.0
    %99 = vmatpush1.xpose.msra.mxu0 0.0
    %100 = vmatprep.subr.mxu0 0.0
    %101 = vmatpush1.xpose.msra.mxu0 0.0
    %102 = vmatprep.subr.mxu0 0.0
    %103 = vmatpush1.xpose.msra.mxu0 0.0
    %104 = vmatprep.subr.mxu0 0.0
    %105 = vmatpush1.xpose.msra.mxu0 0.0
    %106 = vmatprep.subr.mxu0 0.0
    %107 = vmatpush1.xpose.msra.mxu0 0.0
    %108 = vmatprep.subr.mxu0 0.0
    %109 = vmatpush1.xpose.msra.mxu0 0.0
    %110 = vmatprep.subr.mxu0 0.0
    %111 = vmatpush1.xpose.msra.mxu0 0.0
    %112 = vmatprep.subr.mxu0 0.0
    %113 = vmatpush1.xpose.msra.mxu0 0.0
    %114 = vmatprep.subr.mxu0 0.0
    %115 = vmatpush1.xpose.msra.mxu0 0.0
    %116 = vmatprep.subr.mxu0 0.0
    %117 = vmatpush1.xpose.msra.mxu0 0.0
    %118 = vmatprep.subr.mxu0 0.0
    %119 = vmatpush1.xpose.msra.mxu0 0.0
    %120 = vmatprep.subr.mxu0 %v62
    %121 = vmatpush1.xpose.msra.mxu0 %v61
    %122 = vmatprep.subr.mxu0 0.0
    %123 = vmatpush2.xpose.msra.mxu0 0.0
    %124 = vmatprep.subr.mxu0 0.0
    %125 = vmatpush2.xpose.msra.mxu0 0.0
    %126 = vmatprep.subr.mxu0 0.0
    %127 = vmatpush2.xpose.msra.mxu0 0.0
    %128 = vmatprep.subr.mxu0 0.0
    %129 = vmatpush2.xpose.msra.mxu0 0.0
    %130 = vmatprep.subr.mxu0 0.0
    %131 = vmatpush2.xpose.msra.mxu0 0.0
    %132 = vmatprep.subr.mxu0 0.0
    %133 = vmatpush2.xpose.msra.mxu0 0.0
    %134 = vmatprep.subr.mxu0 0.0
    %135 = vmatpush2.xpose.msra.mxu0 0.0
    %136 = vmatprep.subr.mxu0 0.0
    %137 = vmatpush2.xpose.msra.mxu0 0.0
    %138 = vmatprep.subr.mxu0 0.0
    %139 = vmatpush2.xpose.msra.mxu0 0.0
    %140 = vmatprep.subr.mxu0 0.0
    %141 = vmatpush2.xpose.msra.mxu0 0.0
    %142 = vmatprep.subr.mxu0 0.0
    %143 = vmatpush2.xpose.msra.mxu0 0.0
    %144 = vmatprep.subr.mxu0 0.0
    %145 = vmatpush2.xpose.msra.mxu0 0.0
    %146 = vmatprep.subr.mxu0 0.0
    %147 = vmatpush2.xpose.msra.mxu0 0.0
    %148 = vmatprep.subr.mxu0 0.0
    %149 = vmatpush2.xpose.msra.mxu0 0.0
    %150 = vmatprep.subr.mxu0 0.0
    %151 = vmatpush2.xpose.msra.mxu0 0.0
    %152 = vmatprep.subr.mxu0 0.0
    %153 = vmatpush2.xpose.msra.mxu0 0.0
    %154 = vmatprep.mubr.f32.mxu0 %v40
    %155 = vmatmul.mubr.f32.gmra.mxu0 %v39
    %v156 = vpop.f32.mrf.mxu0
    %v157 = vadd.f32 %v88, %v156
    %v158 = vpop.f32.mrf.mxu0
    %159 = vdwg.mxu0
    %160 = vmatprep.subr.mxu0 0.0
    %161 = vmatpush1.xpose.msra.mxu0 0.0
    %162 = vmatprep.subr.mxu0 0.0
    %163 = vmatpush1.xpose.msra.mxu0 0.0
    %164 = vmatprep.subr.mxu0 0.0
    %165 = vmatpush1.xpose.msra.mxu0 0.0
    %166 = vmatprep.subr.mxu0 0.0
    %167 = vmatpush1.xpose.msra.mxu0 0.0
    %168 = vmatprep.subr.mxu0 0.0
    %169 = vmatpush1.xpose.msra.mxu0 0.0
    %170 = vmatprep.subr.mxu0 0.0
    %171 = vmatpush1.xpose.msra.mxu0 0.0
    %172 = vmatprep.subr.mxu0 0.0
    %173 = vmatpush1.xpose.msra.mxu0 0.0
    %174 = vmatprep.subr.mxu0 0.0
    %175 = vmatpush1.xpose.msra.mxu0 0.0
    %176 = vmatprep.subr.mxu0 0.0
    %177 = vmatpush1.xpose.msra.mxu0 0.0
    %178 = vmatprep.subr.mxu0 0.0
    %179 = vmatpush1.xpose.msra.mxu0 0.0
    %180 = vmatprep.subr.mxu0 0.0
    %181 = vmatpush1.xpose.msra.mxu0 0.0
    %182 = vmatprep.subr.mxu0 0.0
    %183 = vmatpush1.xpose.msra.mxu0 0.0
    %184 = vmatprep.subr.mxu0 0.0
    %185 = vmatpush1.xpose.msra.mxu0 0.0
    %186 = vmatprep.subr.mxu0 0.0
    %187 = vmatpush1.xpose.msra.mxu0 0.0
    %188 = vmatprep.subr.mxu0 0.0
    %189 = vmatpush1.xpose.msra.mxu0 0.0
    %190 = vmatprep.subr.mxu0 %v64
    %191 = vmatpush1.xpose.msra.mxu0 %v63
    %192 = vmatprep.subr.mxu0 0.0
    %193 = vmatpush2.xpose.msra.mxu0 0.0
    %194 = vmatprep.subr.mxu0 0.0
    %195 = vmatpush2.xpose.msra.mxu0 0.0
    %196 = vmatprep.subr.mxu0 0.0
    %197 = vmatpush2.xpose.msra.mxu0 0.0
    %198 = vmatprep.subr.mxu0 0.0
    %199 = vmatpush2.xpose.msra.mxu0 0.0
    %200 = vmatprep.subr.mxu0 0.0
    %201 = vmatpush2.xpose.msra.mxu0 0.0
    %202 = vmatprep.subr.mxu0 0.0
    %203 = vmatpush2.xpose.msra.mxu0 0.0
    %204 = vmatprep.subr.mxu0 0.0
    %205 = vmatpush2.xpose.msra.mxu0 0.0
    %206 = vmatprep.subr.mxu0 0.0
    %207 = vmatpush2.xpose.msra.mxu0 0.0
    %208 = vmatprep.subr.mxu0 0.0
    %209 = vmatpush2.xpose.msra.mxu0 0.0
    %210 = vmatprep.subr.mxu0 0.0
    %211 = vmatpush2.xpose.msra.mxu0 0.0
    %212 = vmatprep.subr.mxu0 0.0
    %213 = vmatpush2.xpose.msra.mxu0 0.0
    %214 = vmatprep.subr.mxu0 0.0
    %215 = vmatpush2.xpose.msra.mxu0 0.0
    %216 = vmatprep.subr.mxu0 0.0
    %217 = vmatpush2.xpose.msra.mxu0 0.0
    %218 = vmatprep.subr.mxu0 0.0
    %219 = vmatpush2.xpose.msra.mxu0 0.0
    %220 = vmatprep.subr.mxu0 0.0
    %221 = vmatpush2.xpose.msra.mxu0 0.0
    %222 = vmatprep.subr.mxu0 0.0
    %223 = vmatpush2.xpose.msra.mxu0 0.0
    %224 = vmatprep.mubr.f32.mxu0 %v42
    %225 = vmatmul.mubr.f32.gmra.mxu0 %v41
    %v226 = vpop.f32.mrf.mxu0
    %v227 = vadd.f32 %v157, %v226
    %v228 = vpop.f32.mrf.mxu0
    %229 = vdwg.mxu0
    %230 = vmatprep.subr.mxu0 0.0
    %231 = vmatpush1.xpose.msra.mxu0 0.0
    %232 = vmatprep.subr.mxu0 0.0
    %233 = vmatpush1.xpose.msra.mxu0 0.0
    %234 = vmatprep.subr.mxu0 0.0
    %235 = vmatpush1.xpose.msra.mxu0 0.0
    %236 = vmatprep.subr.mxu0 0.0
    %237 = vmatpush1.xpose.msra.mxu0 0.0
    %238 = vmatprep.subr.mxu0 0.0
    %239 = vmatpush1.xpose.msra.mxu0 0.0
    %240 = vmatprep.subr.mxu0 0.0
    %241 = vmatpush1.xpose.msra.mxu0 0.0
    %242 = vmatprep.subr.mxu0 0.0
    %243 = vmatpush1.xpose.msra.mxu0 0.0
    %244 = vmatprep.subr.mxu0 0.0
    %245 = vmatpush1.xpose.msra.mxu0 0.0
    %246 = vmatprep.subr.mxu0 0.0
    %247 = vmatpush1.xpose.msra.mxu0 0.0
    %248 = vmatprep.subr.mxu0 0.0
    %249 = vmatpush1.xpose.msra.mxu0 0.0
    %250 = vmatprep.subr.mxu0 0.0
    %251 = vmatpush1.xpose.msra.mxu0 0.0
    %252 = vmatprep.subr.mxu0 0.0
    %253 = vmatpush1.xpose.msra.mxu0 0.0
    %254 = vmatprep.subr.mxu0 0.0
    %255 = vmatpush1.xpose.msra.mxu0 0.0
    %256 = vmatprep.subr.mxu0 0.0
    %257 = vmatpush1.xpose.msra.mxu0 0.0
    %258 = vmatprep.subr.mxu0 0.0
    %259 = vmatpush1.xpose.msra.mxu0 0.0
    %260 = vmatprep.subr.mxu0 %v66
    %261 = vmatpush1.xpose.msra.mxu0 %v65
    %262 = vmatprep.subr.mxu0 0.0
    %263 = vmatpush2.xpose.msra.mxu0 0.0
    %264 = vmatprep.subr.mxu0 0.0
    %265 = vmatpush2.xpose.msra.mxu0 0.0
    %266 = vmatprep.subr.mxu0 0.0
    %267 = vmatpush2.xpose.msra.mxu0 0.0
    %268 = vmatprep.subr.mxu0 0.0
    %269 = vmatpush2.xpose.msra.mxu0 0.0
    %270 = vmatprep.subr.mxu0 0.0
    %271 = vmatpush2.xpose.msra.mxu0 0.0
    %272 = vmatprep.subr.mxu0 0.0
    %273 = vmatpush2.xpose.msra.mxu0 0.0
    %274 = vmatprep.subr.mxu0 0.0
    %275 = vmatpush2.xpose.msra.mxu0 0.0
    %276 = vmatprep.subr.mxu0 0.0
    %277 = vmatpush2.xpose.msra.mxu0 0.0
    %278 = vmatprep.subr.mxu0 0.0
    %279 = vmatpush2.xpose.msra.mxu0 0.0
    %280 = vmatprep.subr.mxu0 0.0
    %281 = vmatpush2.xpose.msra.mxu0 0.0
    %282 = vmatprep.subr.mxu0 0.0
    %283 = vmatpush2.xpose.msra.mxu0 0.0
    %284 = vmatprep.subr.mxu0 0.0
    %285 = vmatpush2.xpose.msra.mxu0 0.0
    %286 = vmatprep.subr.mxu0 0.0
    %287 = vmatpush2.xpose.msra.mxu0 0.0
    %288 = vmatprep.subr.mxu0 0.0
    %289 = vmatpush2.xpose.msra.mxu0 0.0
    %290 = vmatprep.subr.mxu0 0.0
    %291 = vmatpush2.xpose.msra.mxu0 0.0
    %292 = vmatprep.subr.mxu0 0.0
    %293 = vmatpush2.xpose.msra.mxu0 0.0
    %294 = vmatprep.mubr.f32.mxu0 %v44
    %295 = vmatmul.mubr.f32.gmra.mxu0 %v43
    %v296 = vpop.f32.mrf.mxu0
    %v297 = vadd.f32 %v227, %v296
    %v298 = vpop.f32.mrf.mxu0
    %299 = vdwg.mxu0
    %300 = vmatprep.subr.mxu0 0.0
    %301 = vmatpush1.xpose.msra.mxu0 0.0
    %302 = vmatprep.subr.mxu0 0.0
    %303 = vmatpush1.xpose.msra.mxu0 0.0
    %304 = vmatprep.subr.mxu0 0.0
    %305 = vmatpush1.xpose.msra.mxu0 0.0
    %306 = vmatprep.subr.mxu0 0.0
    %307 = vmatpush1.xpose.msra.mxu0 0.0
    %308 = vmatprep.subr.mxu0 0.0
    %309 = vmatpush1.xpose.msra.mxu0 0.0
    %310 = vmatprep.subr.mxu0 0.0
    %311 = vmatpush1.xpose.msra.mxu0 0.0
    %312 = vmatprep.subr.mxu0 0.0
    %313 = vmatpush1.xpose.msra.mxu0 0.0
    %314 = vmatprep.subr.mxu0 0.0
    %315 = vmatpush1.xpose.msra.mxu0 0.0
    %316 = vmatprep.subr.mxu0 0.0
    %317 = vmatpush1.xpose.msra.mxu0 0.0
    %318 = vmatprep.subr.mxu0 0.0
    %319 = vmatpush1.xpose.msra.mxu0 0.0
    %320 = vmatprep.subr.mxu0 0.0
    %321 = vmatpush1.xpose.msra.mxu0 0.0
    %322 = vmatprep.subr.mxu0 0.0
    %323 = vmatpush1.xpose.msra.mxu0 0.0
    %324 = vmatprep.subr.mxu0 0.0
    %325 = vmatpush1.xpose.msra.mxu0 0.0
    %326 = vmatprep.subr.mxu0 0.0
    %327 = vmatpush1.xpose.msra.mxu0 0.0
    %328 = vmatprep.subr.mxu0 0.0
    %329 = vmatpush1.xpose.msra.mxu0 0.0
    %330 = vmatprep.subr.mxu0 %v68
    %331 = vmatpush1.xpose.msra.mxu0 %v67
    %332 = vmatprep.subr.mxu0 0.0
    %333 = vmatpush2.xpose.msra.mxu0 0.0
    %334 = vmatprep.subr.mxu0 0.0
    %335 = vmatpush2.xpose.msra.mxu0 0.0
    %336 = vmatprep.subr.mxu0 0.0
    %337 = vmatpush2.xpose.msra.mxu0 0.0
    %338 = vmatprep.subr.mxu0 0.0
    %339 = vmatpush2.xpose.msra.mxu0 0.0
    %340 = vmatprep.subr.mxu0 0.0
    %341 = vmatpush2.xpose.msra.mxu0 0.0
    %342 = vmatprep.subr.mxu0 0.0
    %343 = vmatpush2.xpose.msra.mxu0 0.0
    %344 = vmatprep.subr.mxu0 0.0
    %345 = vmatpush2.xpose.msra.mxu0 0.0
    %346 = vmatprep.subr.mxu0 0.0
    %347 = vmatpush2.xpose.msra.mxu0 0.0
    %348 = vmatprep.subr.mxu0 0.0
    %349 = vmatpush2.xpose.msra.mxu0 0.0
    %350 = vmatprep.subr.mxu0 0.0
    %351 = vmatpush2.xpose.msra.mxu0 0.0
    %352 = vmatprep.subr.mxu0 0.0
    %353 = vmatpush2.xpose.msra.mxu0 0.0
    %354 = vmatprep.subr.mxu0 0.0
    %355 = vmatpush2.xpose.msra.mxu0 0.0
    %356 = vmatprep.subr.mxu0 0.0
    %357 = vmatpush2.xpose.msra.mxu0 0.0
    %358 = vmatprep.subr.mxu0 0.0
    %359 = vmatpush2.xpose.msra.mxu0 0.0
    %360 = vmatprep.subr.mxu0 0.0
    %361 = vmatpush2.xpose.msra.mxu0 0.0
    %362 = vmatprep.subr.mxu0 0.0
    %363 = vmatpush2.xpose.msra.mxu0 0.0
    %364 = vmatprep.mubr.f32.mxu0 %v46
    %365 = vmatmul.mubr.f32.gmra.mxu0 %v45
    %v366 = vpop.f32.mrf.mxu0
    %v367 = vadd.f32 %v297, %v366
    %v368 = vpop.f32.mrf.mxu0
    %369 = vdwg.mxu0
    %370 = vmatprep.subr.mxu0 0.0
    %371 = vmatpush1.xpose.msra.mxu0 0.0
    %372 = vmatprep.subr.mxu0 0.0
    %373 = vmatpush1.xpose.msra.mxu0 0.0
    %374 = vmatprep.subr.mxu0 0.0
    %375 = vmatpush1.xpose.msra.mxu0 0.0
    %376 = vmatprep.subr.mxu0 0.0
    %377 = vmatpush1.xpose.msra.mxu0 0.0
    %378 = vmatprep.subr.mxu0 0.0
    %379 = vmatpush1.xpose.msra.mxu0 0.0
    %380 = vmatprep.subr.mxu0 0.0
    %381 = vmatpush1.xpose.msra.mxu0 0.0
    %382 = vmatprep.subr.mxu0 0.0
    %383 = vmatpush1.xpose.msra.mxu0 0.0
    %384 = vmatprep.subr.mxu0 0.0
    %385 = vmatpush1.xpose.msra.mxu0 0.0
    %386 = vmatprep.subr.mxu0 0.0
    %387 = vmatpush1.xpose.msra.mxu0 0.0
    %388 = vmatprep.subr.mxu0 0.0
    %389 = vmatpush1.xpose.msra.mxu0 0.0
    %390 = vmatprep.subr.mxu0 0.0
    %391 = vmatpush1.xpose.msra.mxu0 0.0
    %392 = vmatprep.subr.mxu0 0.0
    %393 = vmatpush1.xpose.msra.mxu0 0.0
    %394 = vmatprep.subr.mxu0 0.0
    %395 = vmatpush1.xpose.msra.mxu0 0.0
    %396 = vmatprep.subr.mxu0 0.0
    %397 = vmatpush1.xpose.msra.mxu0 0.0
    %398 = vmatprep.subr.mxu0 0.0
    %399 = vmatpush1.xpose.msra.mxu0 0.0
    %400 = vmatprep.subr.mxu0 %v70
    %401 = vmatpush1.xpose.msra.mxu0 %v69
    %402 = vmatprep.subr.mxu0 0.0
    %403 = vmatpush2.xpose.msra.mxu0 0.0
    %404 = vmatprep.subr.mxu0 0.0
    %405 = vmatpush2.xpose.msra.mxu0 0.0
    %406 = vmatprep.subr.mxu0 0.0
    %407 = vmatpush2.xpose.msra.mxu0 0.0
    %408 = vmatprep.subr.mxu0 0.0
    %409 = vmatpush2.xpose.msra.mxu0 0.0
    %410 = vmatprep.subr.mxu0 0.0
    %411 = vmatpush2.xpose.msra.mxu0 0.0
    %412 = vmatprep.subr.mxu0 0.0
    %413 = vmatpush2.xpose.msra.mxu0 0.0
    %414 = vmatprep.subr.mxu0 0.0
    %415 = vmatpush2.xpose.msra.mxu0 0.0
    %416 = vmatprep.subr.mxu0 0.0
    %417 = vmatpush2.xpose.msra.mxu0 0.0
    %418 = vmatprep.subr.mxu0 0.0
    %419 = vmatpush2.xpose.msra.mxu0 0.0
    %420 = vmatprep.subr.mxu0 0.0
    %421 = vmatpush2.xpose.msra.mxu0 0.0
    %422 = vmatprep.subr.mxu0 0.0
    %423 = vmatpush2.xpose.msra.mxu0 0.0
    %424 = vmatprep.subr.mxu0 0.0
    %425 = vmatpush2.xpose.msra.mxu0 0.0
    %426 = vmatprep.subr.mxu0 0.0
    %427 = vmatpush2.xpose.msra.mxu0 0.0
    %428 = vmatprep.subr.mxu0 0.0
    %429 = vmatpush2.xpose.msra.mxu0 0.0
    %430 = vmatprep.subr.mxu0 0.0
    %431 = vmatpush2.xpose.msra.mxu0 0.0
    %432 = vmatprep.subr.mxu0 0.0
    %433 = vmatpush2.xpose.msra.mxu0 0.0
    %434 = vmatprep.mubr.f32.mxu0 %v48
    %435 = vmatmul.mubr.f32.gmra.mxu0 %v47
    %v436 = vpop.f32.mrf.mxu0
    %v437 = vadd.f32 %v367, %v436
    %v438 = vpop.f32.mrf.mxu0
    %439 = vdwg.mxu0
    %440 = vmatprep.subr.mxu0 0.0
    %441 = vmatpush1.xpose.msra.mxu0 0.0
    %442 = vmatprep.subr.mxu0 0.0
    %443 = vmatpush1.xpose.msra.mxu0 0.0
    %444 = vmatprep.subr.mxu0 0.0
    %445 = vmatpush1.xpose.msra.mxu0 0.0
    %446 = vmatprep.subr.mxu0 0.0
    %447 = vmatpush1.xpose.msra.mxu0 0.0
    %448 = vmatprep.subr.mxu0 0.0
    %449 = vmatpush1.xpose.msra.mxu0 0.0
    %450 = vmatprep.subr.mxu0 0.0
    %451 = vmatpush1.xpose.msra.mxu0 0.0
    %452 = vmatprep.subr.mxu0 0.0
    %453 = vmatpush1.xpose.msra.mxu0 0.0
    %454 = vmatprep.subr.mxu0 0.0
    %455 = vmatpush1.xpose.msra.mxu0 0.0
    %456 = vmatprep.subr.mxu0 0.0
    %457 = vmatpush1.xpose.msra.mxu0 0.0
    %458 = vmatprep.subr.mxu0 0.0
    %459 = vmatpush1.xpose.msra.mxu0 0.0
    %460 = vmatprep.subr.mxu0 0.0
    %461 = vmatpush1.xpose.msra.mxu0 0.0
    %462 = vmatprep.subr.mxu0 0.0
    %463 = vmatpush1.xpose.msra.mxu0 0.0
    %464 = vmatprep.subr.mxu0 0.0
    %465 = vmatpush1.xpose.msra.mxu0 0.0
    %466 = vmatprep.subr.mxu0 0.0
    %467 = vmatpush1.xpose.msra.mxu0 0.0
    %468 = vmatprep.subr.mxu0 0.0
    %469 = vmatpush1.xpose.msra.mxu0 0.0
    %470 = vmatprep.subr.mxu0 %v72
    %471 = vmatpush1.xpose.msra.mxu0 %v71
    %472 = vmatprep.subr.mxu0 0.0
    %473 = vmatpush2.xpose.msra.mxu0 0.0
    %474 = vmatprep.subr.mxu0 0.0
    %475 = vmatpush2.xpose.msra.mxu0 0.0
    %476 = vmatprep.subr.mxu0 0.0
    %477 = vmatpush2.xpose.msra.mxu0 0.0
    %478 = vmatprep.subr.mxu0 0.0
    %479 = vmatpush2.xpose.msra.mxu0 0.0
    %480 = vmatprep.subr.mxu0 0.0
    %481 = vmatpush2.xpose.msra.mxu0 0.0
    %482 = vmatprep.subr.mxu0 0.0
    %483 = vmatpush2.xpose.msra.mxu0 0.0
    %484 = vmatprep.subr.mxu0 0.0
    %485 = vmatpush2.xpose.msra.mxu0 0.0
    %486 = vmatprep.subr.mxu0 0.0
    %487 = vmatpush2.xpose.msra.mxu0 0.0
    %488 = vmatprep.subr.mxu0 0.0
    %489 = vmatpush2.xpose.msra.mxu0 0.0
    %490 = vmatprep.subr.mxu0 0.0
    %491 = vmatpush2.xpose.msra.mxu0 0.0
    %492 = vmatprep.subr.mxu0 0.0
    %493 = vmatpush2.xpose.msra.mxu0 0.0
    %494 = vmatprep.subr.mxu0 0.0
    %495 = vmatpush2.xpose.msra.mxu0 0.0
    %496 = vmatprep.subr.mxu0 0.0
    %497 = vmatpush2.xpose.msra.mxu0 0.0
    %498 = vmatprep.subr.mxu0 0.0
    %499 = vmatpush2.xpose.msra.mxu0 0.0
    %500 = vmatprep.subr.mxu0 0.0
    %501 = vmatpush2.xpose.msra.mxu0 0.0
    %502 = vmatprep.subr.mxu0 0.0
    %503 = vmatpush2.xpose.msra.mxu0 0.0
    %504 = vmatprep.mubr.f32.mxu0 %v50
    %505 = vmatmul.mubr.f32.gmra.mxu0 %v49
    %v506 = vpop.f32.mrf.mxu0
    %v507 = vadd.f32 %v437, %v506
    %v508 = vpop.f32.mrf.mxu0
    %509 = vdwg.mxu0
    %510 = vmatprep.subr.mxu0 0.0
    %511 = vmatpush1.xpose.msra.mxu0 0.0
    %512 = vmatprep.subr.mxu0 0.0
    %513 = vmatpush1.xpose.msra.mxu0 0.0
    %514 = vmatprep.subr.mxu0 0.0
    %515 = vmatpush1.xpose.msra.mxu0 0.0
    %516 = vmatprep.subr.mxu0 0.0
    %517 = vmatpush1.xpose.msra.mxu0 0.0
    %518 = vmatprep.subr.mxu0 0.0
    %519 = vmatpush1.xpose.msra.mxu0 0.0
    %520 = vmatprep.subr.mxu0 0.0
    %521 = vmatpush1.xpose.msra.mxu0 0.0
    %522 = vmatprep.subr.mxu0 0.0
    %523 = vmatpush1.xpose.msra.mxu0 0.0
    %524 = vmatprep.subr.mxu0 0.0
    %525 = vmatpush1.xpose.msra.mxu0 0.0
    %526 = vmatprep.subr.mxu0 0.0
    %527 = vmatpush1.xpose.msra.mxu0 0.0
    %528 = vmatprep.subr.mxu0 0.0
    %529 = vmatpush1.xpose.msra.mxu0 0.0
    %530 = vmatprep.subr.mxu0 0.0
    %531 = vmatpush1.xpose.msra.mxu0 0.0
    %532 = vmatprep.subr.mxu0 0.0
    %533 = vmatpush1.xpose.msra.mxu0 0.0
    %534 = vmatprep.subr.mxu0 0.0
    %535 = vmatpush1.xpose.msra.mxu0 0.0
    %536 = vmatprep.subr.mxu0 0.0
    %537 = vmatpush1.xpose.msra.mxu0 0.0
    %538 = vmatprep.subr.mxu0 0.0
    %539 = vmatpush1.xpose.msra.mxu0 0.0
    %540 = vmatprep.subr.mxu0 %v74
    %541 = vmatpush1.xpose.msra.mxu0 %v73
    %542 = vmatprep.subr.mxu0 0.0
    %543 = vmatpush2.xpose.msra.mxu0 0.0
    %544 = vmatprep.subr.mxu0 0.0
    %545 = vmatpush2.xpose.msra.mxu0 0.0
    %546 = vmatprep.subr.mxu0 0.0
    %547 = vmatpush2.xpose.msra.mxu0 0.0
    %548 = vmatprep.subr.mxu0 0.0
    %549 = vmatpush2.xpose.msra.mxu0 0.0
    %550 = vmatprep.subr.mxu0 0.0
    %551 = vmatpush2.xpose.msra.mxu0 0.0
    %552 = vmatprep.subr.mxu0 0.0
    %553 = vmatpush2.xpose.msra.mxu0 0.0
    %554 = vmatprep.subr.mxu0 0.0
    %555 = vmatpush2.xpose.msra.mxu0 0.0
    %556 = vmatprep.subr.mxu0 0.0
    %557 = vmatpush2.xpose.msra.mxu0 0.0
    %558 = vmatprep.subr.mxu0 0.0
    %559 = vmatpush2.xpose.msra.mxu0 0.0
    %560 = vmatprep.subr.mxu0 0.0
    %561 = vmatpush2.xpose.msra.mxu0 0.0
    %562 = vmatprep.subr.mxu0 0.0
    %563 = vmatpush2.xpose.msra.mxu0 0.0
    %564 = vmatprep.subr.mxu0 0.0
    %565 = vmatpush2.xpose.msra.mxu0 0.0
    %566 = vmatprep.subr.mxu0 0.0
    %567 = vmatpush2.xpose.msra.mxu0 0.0
    %568 = vmatprep.subr.mxu0 0.0
    %569 = vmatpush2.xpose.msra.mxu0 0.0
    %570 = vmatprep.subr.mxu0 0.0
    %571 = vmatpush2.xpose.msra.mxu0 0.0
    %572 = vmatprep.subr.mxu0 0.0
    %573 = vmatpush2.xpose.msra.mxu0 0.0
    %574 = vmatprep.mubr.f32.mxu0 %v52
    %575 = vmatmul.mubr.f32.gmra.mxu0 %v51
    %v576 = vpop.f32.mrf.mxu0
    %v577 = vadd.f32 %v507, %v576
    %v578 = vpop.f32.mrf.mxu0
    %579 = vdwg.mxu0
    %580 = vmatprep.subr.mxu0 0.0
    %581 = vmatpush1.xpose.msra.mxu0 0.0
    %582 = vmatprep.subr.mxu0 0.0
    %583 = vmatpush1.xpose.msra.mxu0 0.0
    %584 = vmatprep.subr.mxu0 0.0
    %585 = vmatpush1.xpose.msra.mxu0 0.0
    %586 = vmatprep.subr.mxu0 0.0
    %587 = vmatpush1.xpose.msra.mxu0 0.0
    %588 = vmatprep.subr.mxu0 0.0
    %589 = vmatpush1.xpose.msra.mxu0 0.0
    %590 = vmatprep.subr.mxu0 0.0
    %591 = vmatpush1.xpose.msra.mxu0 0.0
    %592 = vmatprep.subr.mxu0 0.0
    %593 = vmatpush1.xpose.msra.mxu0 0.0
    %594 = vmatprep.subr.mxu0 0.0
    %595 = vmatpush1.xpose.msra.mxu0 0.0
    %596 = vmatprep.subr.mxu0 0.0
    %597 = vmatpush1.xpose.msra.mxu0 0.0
    %598 = vmatprep.subr.mxu0 0.0
    %599 = vmatpush1.xpose.msra.mxu0 0.0
    %600 = vmatprep.subr.mxu0 0.0
    %601 = vmatpush1.xpose.msra.mxu0 0.0
    %602 = vmatprep.subr.mxu0 0.0
    %603 = vmatpush1.xpose.msra.mxu0 0.0
    %604 = vmatprep.subr.mxu0 0.0
    %605 = vmatpush1.xpose.msra.mxu0 0.0
    %606 = vmatprep.subr.mxu0 0.0
    %607 = vmatpush1.xpose.msra.mxu0 0.0
    %608 = vmatprep.subr.mxu0 0.0
    %609 = vmatpush1.xpose.msra.mxu0 0.0
    %610 = vmatprep.subr.mxu0 %v76
    %611 = vmatpush1.xpose.msra.mxu0 %v75
    %612 = vmatprep.subr.mxu0 0.0
    %613 = vmatpush2.xpose.msra.mxu0 0.0
    %614 = vmatprep.subr.mxu0 0.0
    %615 = vmatpush2.xpose.msra.mxu0 0.0
    %616 = vmatprep.subr.mxu0 0.0
    %617 = vmatpush2.xpose.msra.mxu0 0.0
    %618 = vmatprep.subr.mxu0 0.0
    %619 = vmatpush2.xpose.msra.mxu0 0.0
    %620 = vmatprep.subr.mxu0 0.0
    %621 = vmatpush2.xpose.msra.mxu0 0.0
    %622 = vmatprep.subr.mxu0 0.0
    %623 = vmatpush2.xpose.msra.mxu0 0.0
    %624 = vmatprep.subr.mxu0 0.0
    %625 = vmatpush2.xpose.msra.mxu0 0.0
    %626 = vmatprep.subr.mxu0 0.0
    %627 = vmatpush2.xpose.msra.mxu0 0.0
    %628 = vmatprep.subr.mxu0 0.0
    %629 = vmatpush2.xpose.msra.mxu0 0.0
    %630 = vmatprep.subr.mxu0 0.0
    %631 = vmatpush2.xpose.msra.mxu0 0.0
    %632 = vmatprep.subr.mxu0 0.0
    %633 = vmatpush2.xpose.msra.mxu0 0.0
    %634 = vmatprep.subr.mxu0 0.0
    %635 = vmatpush2.xpose.msra.mxu0 0.0
    %636 = vmatprep.subr.mxu0 0.0
    %637 = vmatpush2.xpose.msra.mxu0 0.0
    %638 = vmatprep.subr.mxu0 0.0
    %639 = vmatpush2.xpose.msra.mxu0 0.0
    %640 = vmatprep.subr.mxu0 0.0
    %641 = vmatpush2.xpose.msra.mxu0 0.0
    %642 = vmatprep.subr.mxu0 0.0
    %643 = vmatpush2.xpose.msra.mxu0 0.0
    %644 = vmatprep.mubr.f32.mxu0 %v54
    %645 = vmatmul.mubr.f32.gmra.mxu0 %v53
    %v646 = vpop.f32.mrf.mxu0
    %v647 = vadd.f32 %v577, %v646
    %v648 = vpop.f32.mrf.mxu0
    %649 = vdwg.mxu0
    %650 = vmatprep.subr.mxu0 0.0
    %651 = vmatpush1.xpose.msra.mxu0 0.0
    %652 = vmatprep.subr.mxu0 0.0
    %653 = vmatpush1.xpose.msra.mxu0 0.0
    %654 = vmatprep.subr.mxu0 0.0
    %655 = vmatpush1.xpose.msra.mxu0 0.0
    %656 = vmatprep.subr.mxu0 0.0
    %657 = vmatpush1.xpose.msra.mxu0 0.0
    %658 = vmatprep.subr.mxu0 0.0
    %659 = vmatpush1.xpose.msra.mxu0 0.0
    %660 = vmatprep.subr.mxu0 0.0
    %661 = vmatpush1.xpose.msra.mxu0 0.0
    %662 = vmatprep.subr.mxu0 0.0
    %663 = vmatpush1.xpose.msra.mxu0 0.0
    %664 = vmatprep.subr.mxu0 0.0
    %665 = vmatpush1.xpose.msra.mxu0 0.0
    %666 = vmatprep.subr.mxu0 0.0
    %667 = vmatpush1.xpose.msra.mxu0 0.0
    %668 = vmatprep.subr.mxu0 0.0
    %669 = vmatpush1.xpose.msra.mxu0 0.0
    %670 = vmatprep.subr.mxu0 0.0
    %671 = vmatpush1.xpose.msra.mxu0 0.0
    %672 = vmatprep.subr.mxu0 0.0
    %673 = vmatpush1.xpose.msra.mxu0 0.0
    %674 = vmatprep.subr.mxu0 0.0
    %675 = vmatpush1.xpose.msra.mxu0 0.0
    %676 = vmatprep.subr.mxu0 0.0
    %677 = vmatpush1.xpose.msra.mxu0 0.0
    %678 = vmatprep.subr.mxu0 0.0
    %679 = vmatpush1.xpose.msra.mxu0 0.0
    %680 = vmatprep.subr.mxu0 %v78
    %681 = vmatpush1.xpose.msra.mxu0 %v77
    %682 = vmatprep.subr.mxu0 0.0
    %683 = vmatpush2.xpose.msra.mxu0 0.0
    %684 = vmatprep.subr.mxu0 0.0
    %685 = vmatpush2.xpose.msra.mxu0 0.0
    %686 = vmatprep.subr.mxu0 0.0
    %687 = vmatpush2.xpose.msra.mxu0 0.0
    %688 = vmatprep.subr.mxu0 0.0
    %689 = vmatpush2.xpose.msra.mxu0 0.0
    %690 = vmatprep.subr.mxu0 0.0
    %691 = vmatpush2.xpose.msra.mxu0 0.0
    %692 = vmatprep.subr.mxu0 0.0
    %693 = vmatpush2.xpose.msra.mxu0 0.0
    %694 = vmatprep.subr.mxu0 0.0
    %695 = vmatpush2.xpose.msra.mxu0 0.0
    %696 = vmatprep.subr.mxu0 0.0
    %697 = vmatpush2.xpose.msra.mxu0 0.0
    %698 = vmatprep.subr.mxu0 0.0
    %699 = vmatpush2.xpose.msra.mxu0 0.0
    %700 = vmatprep.subr.mxu0 0.0
    %701 = vmatpush2.xpose.msra.mxu0 0.0
    %702 = vmatprep.subr.mxu0 0.0
    %703 = vmatpush2.xpose.msra.mxu0 0.0
    %704 = vmatprep.subr.mxu0 0.0
    %705 = vmatpush2.xpose.msra.mxu0 0.0
    %706 = vmatprep.subr.mxu0 0.0
    %707 = vmatpush2.xpose.msra.mxu0 0.0
    %708 = vmatprep.subr.mxu0 0.0
    %709 = vmatpush2.xpose.msra.mxu0 0.0
    %710 = vmatprep.subr.mxu0 0.0
    %711 = vmatpush2.xpose.msra.mxu0 0.0
    %712 = vmatprep.subr.mxu0 0.0
    %713 = vmatpush2.xpose.msra.mxu0 0.0
    %714 = vmatprep.mubr.f32.mxu0 %v56
    %715 = vmatmul.mubr.f32.gmra.mxu0 %v55
    %v716 = vpop.f32.mrf.mxu0
    %v717 = vadd.f32 %v647, %v716
    %v718 = vpop.f32.mrf.mxu0
    %719 = vdwg.mxu0
    %720 = vmatprep.subr.mxu0 0.0
    %721 = vmatpush1.xpose.msra.mxu0 0.0
    %722 = vmatprep.subr.mxu0 0.0
    %723 = vmatpush1.xpose.msra.mxu0 0.0
    %724 = vmatprep.subr.mxu0 0.0
    %725 = vmatpush1.xpose.msra.mxu0 0.0
    %726 = vmatprep.subr.mxu0 0.0
    %727 = vmatpush1.xpose.msra.mxu0 0.0
    %728 = vmatprep.subr.mxu0 0.0
    %729 = vmatpush1.xpose.msra.mxu0 0.0
    %730 = vmatprep.subr.mxu0 0.0
    %731 = vmatpush1.xpose.msra.mxu0 0.0
    %732 = vmatprep.subr.mxu0 0.0
    %733 = vmatpush1.xpose.msra.mxu0 0.0
    %734 = vmatprep.subr.mxu0 0.0
    %735 = vmatpush1.xpose.msra.mxu0 0.0
    %736 = vmatprep.subr.mxu0 0.0
    %737 = vmatpush1.xpose.msra.mxu0 0.0
    %738 = vmatprep.subr.mxu0 0.0
    %739 = vmatpush1.xpose.msra.mxu0 0.0
    %740 = vmatprep.subr.mxu0 0.0
    %741 = vmatpush1.xpose.msra.mxu0 0.0
    %742 = vmatprep.subr.mxu0 0.0
    %743 = vmatpush1.xpose.msra.mxu0 0.0
    %744 = vmatprep.subr.mxu0 0.0
    %745 = vmatpush1.xpose.msra.mxu0 0.0
    %746 = vmatprep.subr.mxu0 0.0
    %747 = vmatpush1.xpose.msra.mxu0 0.0
    %748 = vmatprep.subr.mxu0 0.0
    %749 = vmatpush1.xpose.msra.mxu0 0.0
    %750 = vmatprep.subr.mxu0 %v80
    %751 = vmatpush1.xpose.msra.mxu0 %v79
    %752 = vmatprep.subr.mxu0 0.0
    %753 = vmatpush2.xpose.msra.mxu0 0.0
    %754 = vmatprep.subr.mxu0 0.0
    %755 = vmatpush2.xpose.msra.mxu0 0.0
    %756 = vmatprep.subr.mxu0 0.0
    %757 = vmatpush2.xpose.msra.mxu0 0.0
    %758 = vmatprep.subr.mxu0 0.0
    %759 = vmatpush2.xpose.msra.mxu0 0.0
    %760 = vmatprep.subr.mxu0 0.0
    %761 = vmatpush2.xpose.msra.mxu0 0.0
    %762 = vmatprep.subr.mxu0 0.0
    %763 = vmatpush2.xpose.msra.mxu0 0.0
    %764 = vmatprep.subr.mxu0 0.0
    %765 = vmatpush2.xpose.msra.mxu0 0.0
    %766 = vmatprep.subr.mxu0 0.0
    %767 = vmatpush2.xpose.msra.mxu0 0.0
    %768 = vmatprep.subr.mxu0 0.0
    %769 = vmatpush2.xpose.msra.mxu0 0.0
    %770 = vmatprep.subr.mxu0 0.0
    %771 = vmatpush2.xpose.msra.mxu0 0.0
    %772 = vmatprep.subr.mxu0 0.0
    %773 = vmatpush2.xpose.msra.mxu0 0.0
    %774 = vmatprep.subr.mxu0 0.0
    %775 = vmatpush2.xpose.msra.mxu0 0.0
    %776 = vmatprep.subr.mxu0 0.0
    %777 = vmatpush2.xpose.msra.mxu0 0.0
    %778 = vmatprep.subr.mxu0 0.0
    %779 = vmatpush2.xpose.msra.mxu0 0.0
    %780 = vmatprep.subr.mxu0 0.0
    %781 = vmatpush2.xpose.msra.mxu0 0.0
    %782 = vmatprep.subr.mxu0 0.0
    %783 = vmatpush2.xpose.msra.mxu0 0.0
    %784 = vmatprep.mubr.f32.mxu0 %v58
    %785 = vmatmul.mubr.f32.gmra.mxu0 %v57
    %v786 = vpop.f32.mrf.mxu0
    %v787 = vadd.f32 %v717, %v786
    %v788 = vpop.f32.mrf.mxu0
    %789 = vdwg.mxu0
    %790 = vmatprep.subr.mxu0 0.0
    %791 = vmatpush1.xpose.msra.mxu0 0.0
    %792 = vmatprep.subr.mxu0 0.0
    %793 = vmatpush1.xpose.msra.mxu0 0.0
    %794 = vmatprep.subr.mxu0 0.0
    %795 = vmatpush1.xpose.msra.mxu0 0.0
    %796 = vmatprep.subr.mxu0 0.0
    %797 = vmatpush1.xpose.msra.mxu0 0.0
    %798 = vmatprep.subr.mxu0 0.0
    %799 = vmatpush1.xpose.msra.mxu0 0.0
    %800 = vmatprep.subr.mxu0 0.0
    %801 = vmatpush1.xpose.msra.mxu0 0.0
    %802 = vmatprep.subr.mxu0 0.0
    %803 = vmatpush1.xpose.msra.mxu0 0.0
    %804 = vmatprep.subr.mxu0 0.0
    %805 = vmatpush1.xpose.msra.mxu0 0.0
    %806 = vmatprep.subr.mxu0 0.0
    %807 = vmatpush1.xpose.msra.mxu0 0.0
    %808 = vmatprep.subr.mxu0 0.0
    %809 = vmatpush1.xpose.msra.mxu0 0.0
    %810 = vmatprep.subr.mxu0 0.0
    %811 = vmatpush1.xpose.msra.mxu0 0.0
    %812 = vmatprep.subr.mxu0 0.0
    %813 = vmatpush1.xpose.msra.mxu0 0.0
    %814 = vmatprep.subr.mxu0 0.0
    %815 = vmatpush1.xpose.msra.mxu0 0.0
    %816 = vmatprep.subr.mxu0 0.0
    %817 = vmatpush1.xpose.msra.mxu0 0.0
    %818 = vmatprep.subr.mxu0 0.0
    %819 = vmatpush1.xpose.msra.mxu0 0.0
    %820 = vmatprep.subr.mxu0 %v82
    %821 = vmatpush1.xpose.msra.mxu0 %v81
    %822 = vmatprep.subr.mxu0 0.0
    %823 = vmatpush2.xpose.msra.mxu0 0.0
    %824 = vmatprep.subr.mxu0 0.0
    %825 = vmatpush2.xpose.msra.mxu0 0.0
    %826 = vmatprep.subr.mxu0 0.0
    %827 = vmatpush2.xpose.msra.mxu0 0.0
    %828 = vmatprep.subr.mxu0 0.0
    %829 = vmatpush2.xpose.msra.mxu0 0.0
    %830 = vmatprep.subr.mxu0 0.0
    %831 = vmatpush2.xpose.msra.mxu0 0.0
    %832 = vmatprep.subr.mxu0 0.0
    %833 = vmatpush2.xpose.msra.mxu0 0.0
    %834 = vmatprep.subr.mxu0 0.0
    %835 = vmatpush2.xpose.msra.mxu0 0.0
    %836 = vmatprep.subr.mxu0 0.0
    %837 = vmatpush2.xpose.msra.mxu0 0.0
    %838 = vmatprep.subr.mxu0 0.0
    %839 = vmatpush2.xpose.msra.mxu0 0.0
    %840 = vmatprep.subr.mxu0 0.0
    %841 = vmatpush2.xpose.msra.mxu0 0.0
    %842 = vmatprep.subr.mxu0 0.0
    %843 = vmatpush2.xpose.msra.mxu0 0.0
    %844 = vmatprep.subr.mxu0 0.0
    %845 = vmatpush2.xpose.msra.mxu0 0.0
    %846 = vmatprep.subr.mxu0 0.0
    %847 = vmatpush2.xpose.msra.mxu0 0.0
    %848 = vmatprep.subr.mxu0 0.0
    %849 = vmatpush2.xpose.msra.mxu0 0.0
    %850 = vmatprep.subr.mxu0 0.0
    %851 = vmatpush2.xpose.msra.mxu0 0.0
    %852 = vmatprep.subr.mxu0 0.0
    %853 = vmatpush2.xpose.msra.mxu0 0.0
    %854 = vmatprep.mubr.f32.mxu0 %v60
    %855 = vmatmul.mubr.f32.gmra.mxu0 %v59
    %v856 = vpop.f32.mrf.mxu0
    %v857 = vadd.f32 %v787, %v856
    %v858 = vpop.f32.mrf.mxu0
    %859 = vdwg.mxu0
    %vm860 = vcmask 64512
    %861 = vst.msk [vmem:[#allocation7] sm:$0xff] %vm860, %v857
    // Predicated region
    $region22: #{tpu_custom_call.1} parent=1 // pred_check
      _
    $region23: #{tpu_custom_call.1} parent=1 // pred_check_branch
      %863 = sbr.rel (0) target = $region25
    $region24: #{tpu_custom_call.1} parent=1 // pred_region
      %s865 = ssub.s32 128, 128
      %866 = vsyncadd [#allocation4], %s865
      %s868 = sshll.u32 [#allocation7], 4
      %s869 = int_to_ptr.vmem [resolvable:$true] %s868
      %871 = dma.vmem_to_hbm [thread:$0]  %s869, 128, %s3, [#allocation4]
    $region25: #{tpu_custom_call.1} parent=1 // pred_fallthru
      _
    // Predicated region
    $region26: #{tpu_custom_call.1} parent=1 // pred_check
      _
    $region27: #{tpu_custom_call.1} parent=1 // pred_check_branch
      %873 = sbr.rel (0) target = $region29
    $region28: #{tpu_custom_call.1} parent=1 // pred_region
      %874 = dma.done [#allocation4], 128
    $region29: #{tpu_custom_call.1} parent=1 // pred_fallthru
      _
    %875 = vsyncpa [#allocation3], 1
    %876 = vsyncpa [#allocation6], 1
    %877 = vsyncpa [#allocation4], 1

</llo_original>
